<compile_context>
chip_gen: v6e
topology: v6e:2x2x1
jax: 0.10.0
libtpu: 0.0.40
codegen_flags: <defaults>
</compile_context>

<pallas_src>
import jax
import jax.numpy as jnp
from jax.experimental import pallas as pl
from jax.experimental.pallas import tpu as pltpu

INPUT_SIZE = 3            # length L of the 1-D signal (as in predict8.py)
C1_OUT, C2_OUT = 16, 32
K = 2
CONV_OUT = INPUT_SIZE - 2  # == 1
FC1_OUT, FC2_OUT = 50, 1

TILE_B_DEFAULT = 1024      # rows (lanes) per grid step; fits all TPU gens easily


def _round_up(x, m):
    return ((x + m - 1) // m) * m


# --------------------------------------------------------------------------
# Kernel: all activations are (features, TILE_B), batch on the lane axis.
# --------------------------------------------------------------------------
def cnn_kernel(x_ref, wc_ref, bc_ref, w2_ref, b2_ref, w3_ref, b3_ref,
               w4_ref, b4_ref, o_ref):
    x = x_ref[...]                                              # (3, TB)

    # conv1 (both output positions) fused into one matmul + ReLU
    h1 = jnp.dot(wc_ref[...], x,
                 preferred_element_type=jnp.float32) + bc_ref[...]   # (32, TB)
    h1 = jnp.maximum(h1, 0.0)

    # conv2 (single output position) + ReLU
    h2 = jnp.dot(w2_ref[...], h1,
                 preferred_element_type=jnp.float32) + b2_ref[...]   # (32, TB)
    h2 = jnp.maximum(h2, 0.0)

    # fc1 + ReLU
    h3 = jnp.dot(w3_ref[...], h2,
                 preferred_element_type=jnp.float32) + b3_ref[...]   # (50, TB)
    h3 = jnp.maximum(h3, 0.0)

    # fc2 + exp  (output stays lane-dense: (1, TB))
    h4 = jnp.dot(w4_ref[...], h3,
                 preferred_element_type=jnp.float32) + b4_ref[...]   # (1, TB)
    o_ref[...] = jnp.exp(h4)


# --------------------------------------------------------------------------
# One-time parameter prep (hoisted out of the per-call hot path).
# --------------------------------------------------------------------------
def prepare_params(params):
    """Convert PyTorch-layout params to the kernel's (out, in) matmul layout."""
    w1, b1, w2, b2, w3, b3, w4, b4 = params

    # conv1 -> fused (32, 3) matrix.  Row p*16 + c handles output position p,
    # channel c: taps live at columns [p, p+1].
    w1_ck = w1[:, 0, :].astype(jnp.float32)                     # (16, 2)
    wc = jnp.zeros((K * C1_OUT, INPUT_SIZE), jnp.float32)
    wc = wc.at[0:C1_OUT, 0:K].set(w1_ck)                        # position p=0
    wc = wc.at[C1_OUT:2 * C1_OUT, 1:1 + K].set(w1_ck)           # position p=1
    bc = jnp.concatenate([b1, b1]).reshape(K * C1_OUT, 1)       # (32, 1)

    # conv2 weight (32, 16, 2) flattened in (k, c_in) order to match the
    # [p=0 channels | p=1 channels] ordering of h1 above.
    w2f = jnp.transpose(w2, (0, 2, 1)).reshape(C2_OUT, K * C1_OUT)  # (32, 32)
    b2r = b2.reshape(C2_OUT, 1)

    w3m = w3.astype(jnp.float32)                                # (50, 32)
    b3r = b3.reshape(FC1_OUT, 1)
    w4m = w4.astype(jnp.float32)                                # (1, 50)
    b4r = b4.reshape(FC2_OUT, 1)

    return (wc, bc, w2f, b2r, w3m, b3r, w4m, b4r)


# --------------------------------------------------------------------------
# Forward wrapper: batch grid, lane-dense layout, weights resident in VMEM.
# --------------------------------------------------------------------------
def cnn_forward(x_ncl, prepped, *, tile_b=None):
    """x_ncl: (B, 1, INPUT_SIZE) float32, like the PyTorch module."""
    B = x_ncl.shape[0]
    wc, bc, w2f, b2r, w3m, b3r, w4m, b4r = prepped

    # Batch on the lane axis: (B, 1, 3) -> (3, B).
    x_t = jnp.transpose(x_ncl.reshape(B, INPUT_SIZE), (1, 0)).astype(jnp.float32)

    if tile_b is None:
        tile_b = min(TILE_B_DEFAULT, _round_up(max(B, 1), 128))
    b_pad = _round_up(B, tile_b)
    if b_pad != B:
        x_t = jnp.pad(x_t, ((0, 0), (0, b_pad - B)))
    grid = (b_pad // tile_b,)

    def const_spec(arr):
        # Weights/biases: full block, constant index -> fetched into VMEM once.
        return pl.BlockSpec(arr.shape, lambda i: (0, 0))

    out = pl.pallas_call(
        cnn_kernel,
        out_shape=jax.ShapeDtypeStruct((FC2_OUT, b_pad), jnp.float32),
        grid=grid,
        in_specs=[
            pl.BlockSpec((INPUT_SIZE, tile_b), lambda i: (0, i)),   # x tile
            const_spec(wc), const_spec(bc),
            const_spec(w2f), const_spec(b2r),
            const_spec(w3m), const_spec(b3r),
            const_spec(w4m), const_spec(b4r),
        ],
        out_specs=pl.BlockSpec((FC2_OUT, tile_b), lambda i: (0, i)),
        compiler_params=pltpu.CompilerParams(
            dimension_semantics=("parallel",),
            vmem_limit_bytes=32 * 1024 * 1024,
        ),
    )(x_t, wc, bc, w2f, b2r, w3m, b3r, w4m, b4r)

    # Drop batch padding, return (B, 1) like torch.
    return jnp.transpose(out[:, :B], (1, 0))


# --------------------------------------------------------------------------
# Deterministic params + pure-JAX reference (mirrors the PyTorch forward).
# --------------------------------------------------------------------------
def init_params(key):
    ks = jax.random.split(key, 8)

    def unif(k, shape, fan_in):
        bound = 1.0 / jnp.sqrt(jnp.float32(fan_in))
        return jax.random.uniform(k, shape, jnp.float32, -bound, bound)

    w1 = unif(ks[0], (C1_OUT, 1, K), 1 * K)
    b1 = unif(ks[1], (C1_OUT,), 1 * K)
    w2 = unif(ks[2], (C2_OUT, C1_OUT, K), C1_OUT * K)
    b2 = unif(ks[3], (C2_OUT,), C1_OUT * K)
    w3 = unif(ks[4], (FC1_OUT, C2_OUT * CONV_OUT), C2_OUT * CONV_OUT)
    b3 = unif(ks[5], (FC1_OUT,), C2_OUT * CONV_OUT)
    w4 = unif(ks[6], (FC2_OUT, FC1_OUT), FC1_OUT)
    b4 = unif(ks[7], (FC2_OUT,), FC1_OUT)
    return (w1, b1, w2, b2, w3, b3, w4, b4)


def reference_forward(x_ncl, params):
    w1, b1, w2, b2, w3, b3, w4, b4 = params
    B = x_ncl.shape[0]
    x = x_ncl[:, 0, :]                                           # (B, 3)
    # conv1
    h1 = jnp.stack(
        [x[:, p:p + K] @ w1[:, 0, :].T + b1 for p in range(INPUT_SIZE - K + 1)],
        axis=2)                                                  # (B, 16, 2)
    h1 = jnp.maximum(h1, 0.0)
    # conv2 (output length 1)
    h2 = jnp.einsum('bik,oik->bo', h1, w2) + b2                  # (B, 32)
    h2 = jnp.maximum(h2, 0.0)
    h2 = h2.reshape(B, -1)
    h3 = jnp.maximum(h2 @ w3.T + b3, 0.0)                        # (B, 50)
    h4 = h3 @ w4.T + b4                                          # (B, 1)
    return jnp.exp(h4)


if __name__ == "__main__":
    key = jax.random.PRNGKey(0)
    k_x, k_p, k_x2 = jax.random.split(key, 3)

    params = init_params(k_p)
    prepped = prepare_params(params)

    # Small batch (as in the spec): B=2, NCL input.
    B = 2
    x = jax.random.normal(k_x, (B, 1, INPUT_SIZE), jnp.float32)
    out = jax.block_until_ready(cnn_forward(x, prepped))
    ref = reference_forward(x, params)
    assert out.shape == (B, 1)
    assert jnp.allclose(out, ref, rtol=1e-5, atol=1e-5), (out, ref)

    # Non-multiple-of-tile batch to exercise the padding path.
    B2 = 260
    x2 = jax.random.normal(k_x2, (B2, 1, INPUT_SIZE), jnp.float32)
    out2 = jax.block_until_ready(cnn_forward(x2, prepped, tile_b=128))
    ref2 = reference_forward(x2, params)
    assert out2.shape == (B2, 1)
    assert jnp.allclose(out2, ref2, rtol=1e-5, atol=1e-5)

    print("KERNEL_OK")
</pallas_src>

<mosaic_0001>
module attributes {stable_mosaic.version = 11 : i64} {
  func.func @cnn_kernel(%arg0: i32, %arg1: memref<3x128xf32, #tpu.memory_space<vmem>>, %arg2: memref<32x3xf32, #tpu.memory_space<vmem>>, %arg3: memref<32x1xf32, #tpu.memory_space<vmem>>, %arg4: memref<32x32xf32, #tpu.memory_space<vmem>>, %arg5: memref<32x1xf32, #tpu.memory_space<vmem>>, %arg6: memref<50x32xf32, #tpu.memory_space<vmem>>, %arg7: memref<50x1xf32, #tpu.memory_space<vmem>>, %arg8: memref<1x50xf32, #tpu.memory_space<vmem>>, %arg9: memref<1x1xf32, #tpu.memory_space<vmem>>, %arg10: memref<1x128xf32, #tpu.memory_space<vmem>>) attributes {dimension_semantics = [#tpu.dimension_semantics<parallel>], iteration_bounds = array<i64: 1>, scalar_prefetch = 0 : i64, scratch_operands = 0 : i64, tpu.core_type = #tpu.core_type<tc>, window_params = [{transform_indices = @transform_0, window_bounds = array<i64: 3, 128>}, {pipeline_mode = #tpu.pipeline_mode<synchronous>, transform_indices = @transform_1, window_bounds = array<i64: 32, 3>}, {pipeline_mode = #tpu.pipeline_mode<synchronous>, transform_indices = @transform_2, window_bounds = array<i64: 32, 1>}, {pipeline_mode = #tpu.pipeline_mode<synchronous>, transform_indices = @transform_3, window_bounds = array<i64: 32, 32>}, {pipeline_mode = #tpu.pipeline_mode<synchronous>, transform_indices = @transform_4, window_bounds = array<i64: 32, 1>}, {pipeline_mode = #tpu.pipeline_mode<synchronous>, transform_indices = @transform_5, window_bounds = array<i64: 50, 32>}, {pipeline_mode = #tpu.pipeline_mode<synchronous>, transform_indices = @transform_6, window_bounds = array<i64: 50, 1>}, {pipeline_mode = #tpu.pipeline_mode<synchronous>, transform_indices = @transform_7, window_bounds = array<i64: 1, 50>}, {pipeline_mode = #tpu.pipeline_mode<synchronous>, transform_indices = @transform_8, window_bounds = array<i64: 1, 1>}, {transform_indices = @transform_9, window_bounds = array<i64: 1, 128>}]} {
    %c0 = arith.constant 0 : index
    %c0_0 = arith.constant 0 : index
    %0 = vector.load %arg1[%c0, %c0_0] : memref<3x128xf32, #tpu.memory_space<vmem>>, vector<3x128xf32>
    %c0_1 = arith.constant 0 : index
    %c0_2 = arith.constant 0 : index
    %1 = vector.load %arg2[%c0_1, %c0_2] : memref<32x3xf32, #tpu.memory_space<vmem>>, vector<32x3xf32>
    %cst = arith.constant dense<0.000000e+00> : vector<32x128xf32>
    %2 = tpu.matmul %1, %0, %cst {dimension_numbers = #tpu.dot_dimension_numbers<[1], [0], [0], [1], [0, 0, 1, 1], [], []>} : vector<32x3xf32>, vector<3x128xf32>, vector<32x128xf32> -> vector<32x128xf32>
    %c0_3 = arith.constant 0 : index
    %c0_4 = arith.constant 0 : index
    %3 = vector.load %arg3[%c0_3, %c0_4] : memref<32x1xf32, #tpu.memory_space<vmem>>, vector<32x1xf32>
    %4 = vector.broadcast %3 : vector<32x1xf32> to vector<32x128xf32>
    %5 = arith.addf %2, %4 : vector<32x128xf32>
    %cst_5 = arith.constant 0.000000e+00 : f32
    %6 = vector.broadcast %cst_5 : f32 to vector<32x128xf32>
    %7 = arith.maximumf %5, %6 : vector<32x128xf32>
    %c0_6 = arith.constant 0 : index
    %c0_7 = arith.constant 0 : index
    %8 = vector.load %arg4[%c0_6, %c0_7] : memref<32x32xf32, #tpu.memory_space<vmem>>, vector<32x32xf32>
    %cst_8 = arith.constant dense<0.000000e+00> : vector<32x128xf32>
    %9 = tpu.matmul %8, %7, %cst_8 {dimension_numbers = #tpu.dot_dimension_numbers<[1], [0], [0], [1], [0, 0, 1, 1], [], []>} : vector<32x32xf32>, vector<32x128xf32>, vector<32x128xf32> -> vector<32x128xf32>
    %c0_9 = arith.constant 0 : index
    %c0_10 = arith.constant 0 : index
    %10 = vector.load %arg5[%c0_9, %c0_10] : memref<32x1xf32, #tpu.memory_space<vmem>>, vector<32x1xf32>
    %11 = vector.broadcast %10 : vector<32x1xf32> to vector<32x128xf32>
    %12 = arith.addf %9, %11 : vector<32x128xf32>
    %cst_11 = arith.constant 0.000000e+00 : f32
    %13 = vector.broadcast %cst_11 : f32 to vector<32x128xf32>
    %14 = arith.maximumf %12, %13 : vector<32x128xf32>
    %c0_12 = arith.constant 0 : index
    %c0_13 = arith.constant 0 : index
    %15 = vector.load %arg6[%c0_12, %c0_13] : memref<50x32xf32, #tpu.memory_space<vmem>>, vector<50x32xf32>
    %cst_14 = arith.constant dense<0.000000e+00> : vector<50x128xf32>
    %16 = tpu.matmul %15, %14, %cst_14 {dimension_numbers = #tpu.dot_dimension_numbers<[1], [0], [0], [1], [0, 0, 1, 1], [], []>} : vector<50x32xf32>, vector<32x128xf32>, vector<50x128xf32> -> vector<50x128xf32>
    %c0_15 = arith.constant 0 : index
    %c0_16 = arith.constant 0 : index
    %17 = vector.load %arg7[%c0_15, %c0_16] : memref<50x1xf32, #tpu.memory_space<vmem>>, vector<50x1xf32>
    %18 = vector.broadcast %17 : vector<50x1xf32> to vector<50x128xf32>
    %19 = arith.addf %16, %18 : vector<50x128xf32>
    %cst_17 = arith.constant 0.000000e+00 : f32
    %20 = vector.broadcast %cst_17 : f32 to vector<50x128xf32>
    %21 = arith.maximumf %19, %20 : vector<50x128xf32>
    %c0_18 = arith.constant 0 : index
    %c0_19 = arith.constant 0 : index
    %22 = vector.load %arg8[%c0_18, %c0_19] : memref<1x50xf32, #tpu.memory_space<vmem>>, vector<1x50xf32>
    %cst_20 = arith.constant dense<0.000000e+00> : vector<1x128xf32>
    %23 = tpu.matmul %22, %21, %cst_20 {dimension_numbers = #tpu.dot_dimension_numbers<[1], [0], [0], [1], [0, 0, 1, 1], [], []>} : vector<1x50xf32>, vector<50x128xf32>, vector<1x128xf32> -> vector<1x128xf32>
    %c0_21 = arith.constant 0 : index
    %c0_22 = arith.constant 0 : index
    %24 = vector.load %arg9[%c0_21, %c0_22] : memref<1x1xf32, #tpu.memory_space<vmem>>, vector<1x1xf32>
    %25 = vector.broadcast %24 : vector<1x1xf32> to vector<1x128xf32>
    %26 = arith.addf %23, %25 : vector<1x128xf32>
    %27 = math.exp %26 : vector<1x128xf32>
    %c0_23 = arith.constant 0 : index
    %c0_24 = arith.constant 0 : index
    %28 = vector.load %arg10[%c0_23, %c0_24] : memref<1x128xf32, #tpu.memory_space<vmem>>, vector<1x128xf32>
    tpu.vector_store %arg10[%c0_23, %c0_24], %27 {strides = array<i32>} : memref<1x128xf32, #tpu.memory_space<vmem>>, vector<1x128xf32>,
    return
  }
  func.func @transform_0(%arg0: i32) -> (i32, i32) {
    %c0_i32 = arith.constant 0 : i32
    %c0_i32_0 = arith.constant 0 : i32
    return %c0_i32, %arg0 : i32, i32
  }
  func.func @transform_1(%arg0: i32) -> (i32, i32) {
    %c0_i32 = arith.constant 0 : i32
    %c0_i32_0 = arith.constant 0 : i32
    %c0_i32_1 = arith.constant 0 : i32
    return %c0_i32, %c0_i32_0 : i32, i32
  }
  func.func @transform_2(%arg0: i32) -> (i32, i32) {
    %c0_i32 = arith.constant 0 : i32
    %c0_i32_0 = arith.constant 0 : i32
    %c0_i32_1 = arith.constant 0 : i32
    return %c0_i32, %c0_i32_0 : i32, i32
  }
  func.func @transform_3(%arg0: i32) -> (i32, i32) {
    %c0_i32 = arith.constant 0 : i32
    %c0_i32_0 = arith.constant 0 : i32
    %c0_i32_1 = arith.constant 0 : i32
    return %c0_i32, %c0_i32_0 : i32, i32
  }
  func.func @transform_4(%arg0: i32) -> (i32, i32) {
    %c0_i32 = arith.constant 0 : i32
    %c0_i32_0 = arith.constant 0 : i32
    %c0_i32_1 = arith.constant 0 : i32
    return %c0_i32, %c0_i32_0 : i32, i32
  }
  func.func @transform_5(%arg0: i32) -> (i32, i32) {
    %c0_i32 = arith.constant 0 : i32
    %c0_i32_0 = arith.constant 0 : i32
    %c0_i32_1 = arith.constant 0 : i32
    return %c0_i32, %c0_i32_0 : i32, i32
  }
  func.func @transform_6(%arg0: i32) -> (i32, i32) {
    %c0_i32 = arith.constant 0 : i32
    %c0_i32_0 = arith.constant 0 : i32
    %c0_i32_1 = arith.constant 0 : i32
    return %c0_i32, %c0_i32_0 : i32, i32
  }
  func.func @transform_7(%arg0: i32) -> (i32, i32) {
    %c0_i32 = arith.constant 0 : i32
    %c0_i32_0 = arith.constant 0 : i32
    %c0_i32_1 = arith.constant 0 : i32
    return %c0_i32, %c0_i32_0 : i32, i32
  }
  func.func @transform_8(%arg0: i32) -> (i32, i32) {
    %c0_i32 = arith.constant 0 : i32
    %c0_i32_0 = arith.constant 0 : i32
    %c0_i32_1 = arith.constant 0 : i32
    return %c0_i32, %c0_i32_0 : i32, i32
  }
  func.func @transform_9(%arg0: i32) -> (i32, i32) {
    %c0_i32 = arith.constant 0 : i32
    %c0_i32_0 = arith.constant 0 : i32
    return %c0_i32, %arg0 : i32, i32
  }
}

</mosaic_0001>

<llo_original>
// kernel: tpu_custom_call.1
$region0: #{tpu_custom_call.1}
  #allocation0 [shape = 'u32[]', space=smem, size = 0x4, offset = 0x4, fixed_abs, tag = 'smem constant byte address 0x4 - core index']
  #allocation1 [shape = 'u32[144,128]{1,0:T(1,128)}', space=vmem, size = 0x12000, scoped, tag = 'internal scratch']
  #allocation2 [shape = 'f32[1,1]{1,0:T(1,128)S(1)}', space=vmem, size = 0x200, scoped, tag = 'scoped memory for tpu_custom_call.1']
  %s0 = inlined_call_operand.vmem [shape: f32[3,128], index: 0, kind: input, shape index: {}]
  %s1 = inlined_call_operand.vmem [shape: f32[32,3], index: 1, kind: input, shape index: {}]
  %s2 = inlined_call_operand.vmem [shape: f32[32,1], index: 2, kind: input, shape index: {}]
  %s3 = inlined_call_operand.vmem [shape: f32[32,32], index: 3, kind: input, shape index: {}]
  %s4 = inlined_call_operand.vmem [shape: f32[32,1], index: 4, kind: input, shape index: {}]
  %s5 = inlined_call_operand.vmem [shape: f32[50,32], index: 5, kind: input, shape index: {}]
  %s6 = inlined_call_operand.vmem [shape: f32[50,1], index: 6, kind: input, shape index: {}]
  %s7 = inlined_call_operand.vmem [shape: f32[1,50], index: 7, kind: input, shape index: {}]
  %s8 = inlined_call_operand.<no memory space> [shape: f32[1,1], index: 8, kind: input, shape index: {}]
  %s9 = inlined_call_operand.hbm [shape: f32[1,128], index: 9, kind: output, shape index: {}]
  %s10 = sld [smem:[#allocation0]]
  $region46: #{tpu_custom_call.1} parent=0
    _
  %s12 = ssub.s32 1, %s10
  %s13 = scalar_select 0, %s12, %s10
  %v14 = vstv %s8
  %15 = vst [vmem:[#allocation2] sm:$0x1] %v14
  $region1: #{tpu_custom_call.1} parent=0
    #allocation3 [shape = 'u8[512]{0}', space=vmem, size = 0x400, scoped, tag = 'output window, operand 0, single buffered']
    #allocation4 [shape = 's32[1]{0}', space=sflag, size = 0x4, scoped, tag = 'scoped memory for tpu_custom_call.1']
    %16 = vsyncpa [#allocation4], 0
    // Predicated region
    $region2: #{tpu_custom_call.1} parent=1 // pred_check
      _
    $region3: #{tpu_custom_call.1} parent=1 // pred_check_branch
      %18 = sbr.rel (0) target = $region5
    $region4: #{tpu_custom_call.1} parent=1 // pred_region
      _
    $region5: #{tpu_custom_call.1} parent=1 // pred_fallthru
      _
    // Predicated region
    $region6: #{tpu_custom_call.1} parent=1 // pred_check
      _
    $region7: #{tpu_custom_call.1} parent=1 // pred_check_branch
      %20 = sbr.rel (0) target = $region9
    $region8: #{tpu_custom_call.1} parent=1 // pred_region
      _
    $region9: #{tpu_custom_call.1} parent=1 // pred_fallthru
      _
    // Predicated region
    $region10: #{tpu_custom_call.1} parent=1 // pred_check
      _
    $region11: #{tpu_custom_call.1} parent=1 // pred_check_branch
      %22 = sbr.rel (0) target = $region13
    $region12: #{tpu_custom_call.1} parent=1 // pred_region
      _
    $region13: #{tpu_custom_call.1} parent=1 // pred_fallthru
      _
    // Predicated region
    $region14: #{tpu_custom_call.1} parent=1 // pred_check
      _
    $region15: #{tpu_custom_call.1} parent=1 // pred_check_branch
      %24 = sbr.rel (0) target = $region17
    $region16: #{tpu_custom_call.1} parent=1 // pred_region
      _
    $region17: #{tpu_custom_call.1} parent=1 // pred_fallthru
      _
    // Predicated region
    $region18: #{tpu_custom_call.1} parent=1 // pred_check
      _
    $region19: #{tpu_custom_call.1} parent=1 // pred_check_branch
      %26 = sbr.rel (0) target = $region21
    $region20: #{tpu_custom_call.1} parent=1 // pred_region
      _
    $region21: #{tpu_custom_call.1} parent=1 // pred_fallthru
      _
    // Predicated region
    $region22: #{tpu_custom_call.1} parent=1 // pred_check
      _
    $region23: #{tpu_custom_call.1} parent=1 // pred_check_branch
      %28 = sbr.rel (0) target = $region25
    $region24: #{tpu_custom_call.1} parent=1 // pred_region
      _
    $region25: #{tpu_custom_call.1} parent=1 // pred_fallthru
      _
    // Predicated region
    $region26: #{tpu_custom_call.1} parent=1 // pred_check
      _
    $region27: #{tpu_custom_call.1} parent=1 // pred_check_branch
      %30 = sbr.rel (0) target = $region29
    $region28: #{tpu_custom_call.1} parent=1 // pred_region
      _
    $region29: #{tpu_custom_call.1} parent=1 // pred_fallthru
      _
    // Predicated region
    $region30: #{tpu_custom_call.1} parent=1 // pred_check
      _
    $region31: #{tpu_custom_call.1} parent=1 // pred_check_branch
      %32 = sbr.rel (0) target = $region33
    $region32: #{tpu_custom_call.1} parent=1 // pred_region
      _
    $region33: #{tpu_custom_call.1} parent=1 // pred_fallthru
      _
    // Predicated region
    $region34: #{tpu_custom_call.1} parent=1 // pred_check
      _
    $region35: #{tpu_custom_call.1} parent=1 // pred_check_branch
      %34 = sbr.rel (0) target = $region37
    $region36: #{tpu_custom_call.1} parent=1 // pred_region
      _
    $region37: #{tpu_custom_call.1} parent=1 // pred_fallthru
      _
    %v35 = vld [vmem:[%s0] sm:$0x7]
    %v36 = vld [vmem:[%s1] sm:$0xff]
    %v37 = vld [vmem:[%s1 + $0x8] sm:$0xff]
    %v38 = vld [vmem:[%s1 + $0x10] sm:$0xff]
    %v39 = vld [vmem:[%s1 + $0x18] sm:$0xff]
    %v40 = vld [vmem:[%s2] sm:$0xff]
    %v41 = vld [vmem:[%s2 + $0x8] sm:$0xff]
    %v42 = vld [vmem:[%s2 + $0x10] sm:$0xff]
    %v43 = vld [vmem:[%s2 + $0x18] sm:$0xff]
    %45 = vset.pattern.permute.xlu0 0
    %46 = vperm.xlu0 %45, %v40
    %v47 = vpop.permute.xlu0 %46
    %50 = vset.pattern.permute.xlu0 0
    %51 = vperm.xlu0 %50, %v41
    %v52 = vpop.permute.xlu0 %51
    %55 = vset.pattern.permute.xlu0 0
    %56 = vperm.xlu0 %55, %v42
    %v57 = vpop.permute.xlu0 %56
    %60 = vset.pattern.permute.xlu0 0
    %61 = vperm.xlu0 %60, %v43
    %v62 = vpop.permute.xlu0 %61
    %vm64 = vcmask 23552
    %v66 = vsel %vm64, %v36, 0
    %v69 = vsel %vm64, %v37, 0
    %v72 = vsel %vm64, %v38, 0
    %v75 = vsel %vm64, %v39, 0
    %vm77 = vcmask 1042432
    %v79 = vsel %vm77, %v35, 0
    %81 = vmatprep.subr.mxu0 0.0
    %82 = vmatpush1.msra.mxu0 0.0
    %83 = vmatprep.subr.mxu0 0.0
    %84 = vmatpush1.msra.mxu0 0.0
    %85 = vmatprep.subr.mxu0 0.0
    %86 = vmatpush1.msra.mxu0 0.0
    %87 = vmatprep.subr.mxu0 0.0
    %88 = vmatpush1.msra.mxu0 0.0
    %89 = vmatprep.subr.mxu0 0.0
    %90 = vmatpush1.msra.mxu0 0.0
    %91 = vmatprep.subr.mxu0 0.0
    %92 = vmatpush1.msra.mxu0 0.0
    %93 = vmatprep.subr.mxu0 0.0
    %94 = vmatpush1.msra.mxu0 0.0
    %95 = vmatprep.subr.mxu0 0.0
    %96 = vmatpush1.msra.mxu0 0.0
    %97 = vmatprep.subr.mxu0 0.0
    %98 = vmatpush1.msra.mxu0 0.0
    %99 = vmatprep.subr.mxu0 0.0
    %100 = vmatpush1.msra.mxu0 0.0
    %101 = vmatprep.subr.mxu0 0.0
    %102 = vmatpush1.msra.mxu0 0.0
    %103 = vmatprep.subr.mxu0 0.0
    %104 = vmatpush1.msra.mxu0 0.0
    %105 = vmatprep.subr.mxu0 0.0
    %106 = vmatpush1.msra.mxu0 0.0
    %107 = vmatprep.subr.mxu0 0.0
    %108 = vmatpush1.msra.mxu0 0.0
    %109 = vmatprep.subr.mxu0 0.0
    %110 = vmatpush1.msra.mxu0 0.0
    %111 = vmatprep.subr.mxu0 0.0
    %112 = vmatpush1.msra.mxu0 %v79
    %113 = vmatprep.subr.mxu0 0.0
    %114 = vmatpush2.msra.mxu0 0.0
    %115 = vmatprep.subr.mxu0 0.0
    %116 = vmatpush2.msra.mxu0 0.0
    %117 = vmatprep.subr.mxu0 0.0
    %118 = vmatpush2.msra.mxu0 0.0
    %119 = vmatprep.subr.mxu0 0.0
    %120 = vmatpush2.msra.mxu0 0.0
    %121 = vmatprep.subr.mxu0 0.0
    %122 = vmatpush2.msra.mxu0 0.0
    %123 = vmatprep.subr.mxu0 0.0
    %124 = vmatpush2.msra.mxu0 0.0
    %125 = vmatprep.subr.mxu0 0.0
    %126 = vmatpush2.msra.mxu0 0.0
    %127 = vmatprep.subr.mxu0 0.0
    %128 = vmatpush2.msra.mxu0 0.0
    %129 = vmatprep.subr.mxu0 0.0
    %130 = vmatpush2.msra.mxu0 0.0
    %131 = vmatprep.subr.mxu0 0.0
    %132 = vmatpush2.msra.mxu0 0.0
    %133 = vmatprep.subr.mxu0 0.0
    %134 = vmatpush2.msra.mxu0 0.0
    %135 = vmatprep.subr.mxu0 0.0
    %136 = vmatpush2.msra.mxu0 0.0
    %137 = vmatprep.subr.mxu0 0.0
    %138 = vmatpush2.msra.mxu0 0.0
    %139 = vmatprep.subr.mxu0 0.0
    %140 = vmatpush2.msra.mxu0 0.0
    %141 = vmatprep.subr.mxu0 0.0
    %142 = vmatpush2.msra.mxu0 0.0
    %143 = vmatprep.subr.mxu0 0.0
    %144 = vmatpush2.msra.mxu0 0.0
    %145 = vmatprep.mubr.f32.mxu0 0.0
    %146 = vmatmul.mubr.f32.gmra.mxu0 %v66
    %v147 = vpop.f32.mrf.mxu0
    %v148 = vadd.f32 %v47, %v147
    %v149 = vpop.f32.mrf.mxu0
    %150 = vmatprep.mubr.f32.mxu0 0.0
    %151 = vmatmul.mubr.f32.gmra.mxu0 %v69
    %v152 = vpop.f32.mrf.mxu0
    %v153 = vadd.f32 %v52, %v152
    %v154 = vpop.f32.mrf.mxu0
    %155 = vmatprep.mubr.f32.mxu0 0.0
    %156 = vmatmul.mubr.f32.gmra.mxu0 %v72
    %v157 = vpop.f32.mrf.mxu0
    %v158 = vadd.f32 %v57, %v157
    %v159 = vpop.f32.mrf.mxu0
    %160 = vmatprep.mubr.f32.mxu0 0.0
    %161 = vmatmul.mubr.f32.gmra.mxu0 %v75
    %v162 = vpop.f32.mrf.mxu0
    %v163 = vadd.f32 %v62, %v162
    %v164 = vpop.f32.mrf.mxu0
    %165 = vdwg.mxu0
    %v166 = vmax.f32 %v148, 0.0
    %v167 = vmax.f32 %v153, 0.0
    %v168 = vmax.f32 %v158, 0.0
    %v169 = vmax.f32 %v163, 0.0
    %v170 = vld [vmem:[%s3] sm:$0xff]
    %v171 = vld [vmem:[%s3 + $0x8] sm:$0xff]
    %v172 = vld [vmem:[%s3 + $0x10] sm:$0xff]
    %v173 = vld [vmem:[%s3 + $0x18] sm:$0xff]
    %v174 = vld [vmem:[%s4] sm:$0xff]
    %v175 = vld [vmem:[%s4 + $0x8] sm:$0xff]
    %v176 = vld [vmem:[%s4 + $0x10] sm:$0xff]
    %v177 = vld [vmem:[%s4 + $0x18] sm:$0xff]
    %179 = vset.pattern.permute.xlu0 0
    %180 = vperm.xlu0 %179, %v174
    %v181 = vpop.permute.xlu0 %180
    %184 = vset.pattern.permute.xlu0 0
    %185 = vperm.xlu0 %184, %v175
    %v186 = vpop.permute.xlu0 %185
    %189 = vset.pattern.permute.xlu0 0
    %190 = vperm.xlu0 %189, %v176
    %v191 = vpop.permute.xlu0 %190
    %194 = vset.pattern.permute.xlu0 0
    %195 = vperm.xlu0 %194, %v177
    %v196 = vpop.permute.xlu0 %195
    %vm198 = vcmask 261120
    %v200 = vsel %vm198, %v170, 0
    %v203 = vsel %vm198, %v171, 0
    %v206 = vsel %vm198, %v172, 0
    %v209 = vsel %vm198, %v173, 0
    %211 = vmatprep.subr.mxu0 0.0
    %212 = vmatpush1.msra.mxu0 0.0
    %213 = vmatprep.subr.mxu0 0.0
    %214 = vmatpush1.msra.mxu0 0.0
    %215 = vmatprep.subr.mxu0 0.0
    %216 = vmatpush1.msra.mxu0 0.0
    %217 = vmatprep.subr.mxu0 0.0
    %218 = vmatpush1.msra.mxu0 0.0
    %219 = vmatprep.subr.mxu0 0.0
    %220 = vmatpush1.msra.mxu0 0.0
    %221 = vmatprep.subr.mxu0 0.0
    %222 = vmatpush1.msra.mxu0 0.0
    %223 = vmatprep.subr.mxu0 0.0
    %224 = vmatpush1.msra.mxu0 0.0
    %225 = vmatprep.subr.mxu0 0.0
    %226 = vmatpush1.msra.mxu0 0.0
    %227 = vmatprep.subr.mxu0 0.0
    %228 = vmatpush1.msra.mxu0 0.0
    %229 = vmatprep.subr.mxu0 0.0
    %230 = vmatpush1.msra.mxu0 0.0
    %231 = vmatprep.subr.mxu0 0.0
    %232 = vmatpush1.msra.mxu0 0.0
    %233 = vmatprep.subr.mxu0 0.0
    %234 = vmatpush1.msra.mxu0 0.0
    %235 = vmatprep.subr.mxu0 0.0
    %236 = vmatpush1.msra.mxu0 %v169
    %237 = vmatprep.subr.mxu0 0.0
    %238 = vmatpush1.msra.mxu0 %v168
    %239 = vmatprep.subr.mxu0 0.0
    %240 = vmatpush1.msra.mxu0 %v167
    %241 = vmatprep.subr.mxu0 0.0
    %242 = vmatpush1.msra.mxu0 %v166
    %243 = vmatprep.subr.mxu0 0.0
    %244 = vmatpush2.msra.mxu0 0.0
    %245 = vmatprep.subr.mxu0 0.0
    %246 = vmatpush2.msra.mxu0 0.0
    %247 = vmatprep.subr.mxu0 0.0
    %248 = vmatpush2.msra.mxu0 0.0
    %249 = vmatprep.subr.mxu0 0.0
    %250 = vmatpush2.msra.mxu0 0.0
    %251 = vmatprep.subr.mxu0 0.0
    %252 = vmatpush2.msra.mxu0 0.0
    %253 = vmatprep.subr.mxu0 0.0
    %254 = vmatpush2.msra.mxu0 0.0
    %255 = vmatprep.subr.mxu0 0.0
    %256 = vmatpush2.msra.mxu0 0.0
    %257 = vmatprep.subr.mxu0 0.0
    %258 = vmatpush2.msra.mxu0 0.0
    %259 = vmatprep.subr.mxu0 0.0
    %260 = vmatpush2.msra.mxu0 0.0
    %261 = vmatprep.subr.mxu0 0.0
    %262 = vmatpush2.msra.mxu0 0.0
    %263 = vmatprep.subr.mxu0 0.0
    %264 = vmatpush2.msra.mxu0 0.0
    %265 = vmatprep.subr.mxu0 0.0
    %266 = vmatpush2.msra.mxu0 0.0
    %267 = vmatprep.subr.mxu0 0.0
    %268 = vmatpush2.msra.mxu0 0.0
    %269 = vmatprep.subr.mxu0 0.0
    %270 = vmatpush2.msra.mxu0 0.0
    %271 = vmatprep.subr.mxu0 0.0
    %272 = vmatpush2.msra.mxu0 0.0
    %273 = vmatprep.subr.mxu0 0.0
    %274 = vmatpush2.msra.mxu0 0.0
    %275 = vmatprep.mubr.f32.mxu0 0.0
    %276 = vmatmul.mubr.f32.gmra.mxu0 %v200
    %v277 = vpop.f32.mrf.mxu0
    %v278 = vadd.f32 %v181, %v277
    %v279 = vpop.f32.mrf.mxu0
    %280 = vmatprep.mubr.f32.mxu0 0.0
    %281 = vmatmul.mubr.f32.gmra.mxu0 %v203
    %v282 = vpop.f32.mrf.mxu0
    %v283 = vadd.f32 %v186, %v282
    %v284 = vpop.f32.mrf.mxu0
    %285 = vmatprep.mubr.f32.mxu0 0.0
    %286 = vmatmul.mubr.f32.gmra.mxu0 %v206
    %v287 = vpop.f32.mrf.mxu0
    %v288 = vadd.f32 %v191, %v287
    %v289 = vpop.f32.mrf.mxu0
    %290 = vmatprep.mubr.f32.mxu0 0.0
    %291 = vmatmul.mubr.f32.gmra.mxu0 %v209
    %v292 = vpop.f32.mrf.mxu0
    %v293 = vadd.f32 %v196, %v292
    %v294 = vpop.f32.mrf.mxu0
    %295 = vdwg.mxu0
    %v296 = vmax.f32 %v278, 0.0
    %v297 = vmax.f32 %v283, 0.0
    %v298 = vmax.f32 %v288, 0.0
    %v299 = vmax.f32 %v293, 0.0
    %v300 = vld [vmem:[%s5] sm:$0xff]
    %v301 = vld [vmem:[%s5 + $0x8] sm:$0xff]
    %v302 = vld [vmem:[%s5 + $0x10] sm:$0xff]
    %v303 = vld [vmem:[%s5 + $0x18] sm:$0xff]
    %v304 = vld [vmem:[%s5 + $0x20] sm:$0xff]
    %v305 = vld [vmem:[%s5 + $0x28] sm:$0xff]
    %v306 = vld [vmem:[%s5 + $0x30] sm:$0x3]
    %v307 = vld [vmem:[%s6] sm:$0xff]
    %v308 = vld [vmem:[%s6 + $0x8] sm:$0xff]
    %v309 = vld [vmem:[%s6 + $0x10] sm:$0xff]
    %v310 = vld [vmem:[%s6 + $0x18] sm:$0xff]
    %v311 = vld [vmem:[%s6 + $0x20] sm:$0xff]
    %v312 = vld [vmem:[%s6 + $0x28] sm:$0xff]
    %v313 = vld [vmem:[%s6 + $0x30] sm:$0x3]
    %315 = vset.pattern.permute.xlu0 0
    %316 = vperm.xlu0 %315, %v307
    %v317 = vpop.permute.xlu0 %316
    %320 = vset.pattern.permute.xlu0 0
    %321 = vperm.xlu0 %320, %v308
    %v322 = vpop.permute.xlu0 %321
    %325 = vset.pattern.permute.xlu0 0
    %326 = vperm.xlu0 %325, %v309
    %v327 = vpop.permute.xlu0 %326
    %330 = vset.pattern.permute.xlu0 0
    %331 = vperm.xlu0 %330, %v310
    %v332 = vpop.permute.xlu0 %331
    %335 = vset.pattern.permute.xlu0 0
    %336 = vperm.xlu0 %335, %v311
    %v337 = vpop.permute.xlu0 %336
    %340 = vset.pattern.permute.xlu0 0
    %341 = vperm.xlu0 %340, %v312
    %v342 = vpop.permute.xlu0 %341
    %345 = vset.pattern.permute.xlu0 0
    %346 = vperm.xlu0 %345, %v313
    %v347 = vpop.permute.xlu0 %346
    %v350 = vsel %vm198, %v300, 0
    %v353 = vsel %vm198, %v301, 0
    %v356 = vsel %vm198, %v302, 0
    %v359 = vsel %vm198, %v303, 0
    %v362 = vsel %vm198, %v304, 0
    %v365 = vsel %vm198, %v305, 0
    %v368 = vsel %vm198, %v306, 0
    %370 = vmatprep.subr.mxu0 0.0
    %371 = vmatpush1.msra.mxu0 0.0
    %372 = vmatprep.subr.mxu0 0.0
    %373 = vmatpush1.msra.mxu0 0.0
    %374 = vmatprep.subr.mxu0 0.0
    %375 = vmatpush1.msra.mxu0 0.0
    %376 = vmatprep.subr.mxu0 0.0
    %377 = vmatpush1.msra.mxu0 0.0
    %378 = vmatprep.subr.mxu0 0.0
    %379 = vmatpush1.msra.mxu0 0.0
    %380 = vmatprep.subr.mxu0 0.0
    %381 = vmatpush1.msra.mxu0 0.0
    %382 = vmatprep.subr.mxu0 0.0
    %383 = vmatpush1.msra.mxu0 0.0
    %384 = vmatprep.subr.mxu0 0.0
    %385 = vmatpush1.msra.mxu0 0.0
    %386 = vmatprep.subr.mxu0 0.0
    %387 = vmatpush1.msra.mxu0 0.0
    %388 = vmatprep.subr.mxu0 0.0
    %389 = vmatpush1.msra.mxu0 0.0
    %390 = vmatprep.subr.mxu0 0.0
    %391 = vmatpush1.msra.mxu0 0.0
    %392 = vmatprep.subr.mxu0 0.0
    %393 = vmatpush1.msra.mxu0 0.0
    %394 = vmatprep.subr.mxu0 0.0
    %395 = vmatpush1.msra.mxu0 %v299
    %396 = vmatprep.subr.mxu0 0.0
    %397 = vmatpush1.msra.mxu0 %v298
    %398 = vmatprep.subr.mxu0 0.0
    %399 = vmatpush1.msra.mxu0 %v297
    %400 = vmatprep.subr.mxu0 0.0
    %401 = vmatpush1.msra.mxu0 %v296
    %402 = vmatprep.subr.mxu0 0.0
    %403 = vmatpush2.msra.mxu0 0.0
    %404 = vmatprep.subr.mxu0 0.0
    %405 = vmatpush2.msra.mxu0 0.0
    %406 = vmatprep.subr.mxu0 0.0
    %407 = vmatpush2.msra.mxu0 0.0
    %408 = vmatprep.subr.mxu0 0.0
    %409 = vmatpush2.msra.mxu0 0.0
    %410 = vmatprep.subr.mxu0 0.0
    %411 = vmatpush2.msra.mxu0 0.0
    %412 = vmatprep.subr.mxu0 0.0
    %413 = vmatpush2.msra.mxu0 0.0
    %414 = vmatprep.subr.mxu0 0.0
    %415 = vmatpush2.msra.mxu0 0.0
    %416 = vmatprep.subr.mxu0 0.0
    %417 = vmatpush2.msra.mxu0 0.0
    %418 = vmatprep.subr.mxu0 0.0
    %419 = vmatpush2.msra.mxu0 0.0
    %420 = vmatprep.subr.mxu0 0.0
    %421 = vmatpush2.msra.mxu0 0.0
    %422 = vmatprep.subr.mxu0 0.0
    %423 = vmatpush2.msra.mxu0 0.0
    %424 = vmatprep.subr.mxu0 0.0
    %425 = vmatpush2.msra.mxu0 0.0
    %426 = vmatprep.subr.mxu0 0.0
    %427 = vmatpush2.msra.mxu0 0.0
    %428 = vmatprep.subr.mxu0 0.0
    %429 = vmatpush2.msra.mxu0 0.0
    %430 = vmatprep.subr.mxu0 0.0
    %431 = vmatpush2.msra.mxu0 0.0
    %432 = vmatprep.subr.mxu0 0.0
    %433 = vmatpush2.msra.mxu0 0.0
    %434 = vmatprep.mubr.f32.mxu0 0.0
    %435 = vmatmul.mubr.f32.gmra.mxu0 %v350
    %v436 = vpop.f32.mrf.mxu0
    %v437 = vadd.f32 %v317, %v436
    %v438 = vpop.f32.mrf.mxu0
    %439 = vmatprep.mubr.f32.mxu0 0.0
    %440 = vmatmul.mubr.f32.gmra.mxu0 %v353
    %v441 = vpop.f32.mrf.mxu0
    %v442 = vadd.f32 %v322, %v441
    %v443 = vpop.f32.mrf.mxu0
    %444 = vmatprep.mubr.f32.mxu0 0.0
    %445 = vmatmul.mubr.f32.gmra.mxu0 %v356
    %v446 = vpop.f32.mrf.mxu0
    %v447 = vadd.f32 %v327, %v446
    %v448 = vpop.f32.mrf.mxu0
    %449 = vmatprep.mubr.f32.mxu0 0.0
    %450 = vmatmul.mubr.f32.gmra.mxu0 %v359
    %v451 = vpop.f32.mrf.mxu0
    %v452 = vadd.f32 %v332, %v451
    %v453 = vpop.f32.mrf.mxu0
    %454 = vmatprep.mubr.f32.mxu0 0.0
    %455 = vmatmul.mubr.f32.gmra.mxu0 %v362
    %v456 = vpop.f32.mrf.mxu0
    %v457 = vadd.f32 %v337, %v456
    %v458 = vpop.f32.mrf.mxu0
    %459 = vmatprep.mubr.f32.mxu0 0.0
    %460 = vmatmul.mubr.f32.gmra.mxu0 %v365
    %v461 = vpop.f32.mrf.mxu0
    %v462 = vadd.f32 %v342, %v461
    %v463 = vpop.f32.mrf.mxu0
    %464 = vmatprep.mubr.f32.mxu0 0.0
    %465 = vmatmul.mubr.f32.gmra.mxu0 %v368
    %v466 = vpop.f32.mrf.mxu0
    %v467 = vadd.f32 %v347, %v466
    %v468 = vpop.f32.mrf.mxu0
    %469 = vdwg.mxu0
    %v470 = vmax.f32 %v437, 0.0
    %v471 = vmax.f32 %v442, 0.0
    %v472 = vmax.f32 %v447, 0.0
    %v473 = vmax.f32 %v452, 0.0
    %v474 = vmax.f32 %v457, 0.0
    %v475 = vmax.f32 %v462, 0.0
    %v476 = vmax.f32 %v467, 0.0
    %v477 = vld [vmem:[%s7] sm:$0x1]
    %v478 = vld [vmem:[#allocation2] sm:$0x1]
    %480 = vset.pattern.permute.xlu0 0
    %481 = vperm.xlu0 %480, %v478
    %v482 = vpop.permute.xlu0 %481
    %v484 = vlaneseq
    %v485 = vshrl.u32 %v484, 7
    %v486 = vsub.s32 0, %v485
    %v487 = vrot.slane %v482, %v486
    %vm488 = vcmask 408576
    %v490 = vsel %vm488, %v477, 0
    %vm492 = vcmask 1041408
    %v494 = vsel %vm492, %v476, 0
    %496 = vmatprep.subr.mxu0 0.0
    %497 = vmatpush1.msra.mxu0 0.0
    %498 = vmatprep.subr.mxu0 0.0
    %499 = vmatpush1.msra.mxu0 0.0
    %500 = vmatprep.subr.mxu0 0.0
    %501 = vmatpush1.msra.mxu0 0.0
    %502 = vmatprep.subr.mxu0 0.0
    %503 = vmatpush1.msra.mxu0 0.0
    %504 = vmatprep.subr.mxu0 0.0
    %505 = vmatpush1.msra.mxu0 0.0
    %506 = vmatprep.subr.mxu0 0.0
    %507 = vmatpush1.msra.mxu0 0.0
    %508 = vmatprep.subr.mxu0 0.0
    %509 = vmatpush1.msra.mxu0 0.0
    %510 = vmatprep.subr.mxu0 0.0
    %511 = vmatpush1.msra.mxu0 0.0
    %512 = vmatprep.subr.mxu0 0.0
    %513 = vmatpush1.msra.mxu0 0.0
    %514 = vmatprep.subr.mxu0 0.0
    %515 = vmatpush1.msra.mxu0 %v494
    %516 = vmatprep.subr.mxu0 0.0
    %517 = vmatpush1.msra.mxu0 %v475
    %518 = vmatprep.subr.mxu0 0.0
    %519 = vmatpush1.msra.mxu0 %v474
    %520 = vmatprep.subr.mxu0 0.0
    %521 = vmatpush1.msra.mxu0 %v473
    %522 = vmatprep.subr.mxu0 0.0
    %523 = vmatpush1.msra.mxu0 %v472
    %524 = vmatprep.subr.mxu0 0.0
    %525 = vmatpush1.msra.mxu0 %v471
    %526 = vmatprep.subr.mxu0 0.0
    %527 = vmatpush1.msra.mxu0 %v470
    %528 = vmatprep.subr.mxu0 0.0
    %529 = vmatpush2.msra.mxu0 0.0
    %530 = vmatprep.subr.mxu0 0.0
    %531 = vmatpush2.msra.mxu0 0.0
    %532 = vmatprep.subr.mxu0 0.0
    %533 = vmatpush2.msra.mxu0 0.0
    %534 = vmatprep.subr.mxu0 0.0
    %535 = vmatpush2.msra.mxu0 0.0
    %536 = vmatprep.subr.mxu0 0.0
    %537 = vmatpush2.msra.mxu0 0.0
    %538 = vmatprep.subr.mxu0 0.0
    %539 = vmatpush2.msra.mxu0 0.0
    %540 = vmatprep.subr.mxu0 0.0
    %541 = vmatpush2.msra.mxu0 0.0
    %542 = vmatprep.subr.mxu0 0.0
    %543 = vmatpush2.msra.mxu0 0.0
    %544 = vmatprep.subr.mxu0 0.0
    %545 = vmatpush2.msra.mxu0 0.0
    %546 = vmatprep.subr.mxu0 0.0
    %547 = vmatpush2.msra.mxu0 0.0
    %548 = vmatprep.subr.mxu0 0.0
    %549 = vmatpush2.msra.mxu0 0.0
    %550 = vmatprep.subr.mxu0 0.0
    %551 = vmatpush2.msra.mxu0 0.0
    %552 = vmatprep.subr.mxu0 0.0
    %553 = vmatpush2.msra.mxu0 0.0
    %554 = vmatprep.subr.mxu0 0.0
    %555 = vmatpush2.msra.mxu0 0.0
    %556 = vmatprep.subr.mxu0 0.0
    %557 = vmatpush2.msra.mxu0 0.0
    %558 = vmatprep.subr.mxu0 0.0
    %559 = vmatpush2.msra.mxu0 0.0
    %560 = vmatprep.mubr.f32.mxu0 0.0
    %561 = vmatmul.mubr.f32.gmra.mxu0 %v490
    %v562 = vpop.f32.mrf.mxu0
    %v563 = vadd.f32 %v487, %v562
    %v564 = vpop.f32.mrf.mxu0
    %565 = vdwg.mxu0
    %v566 = vmul.f32 %v563, 1.442695
    %v567 = vpow.pop %v566
    %568 = vst [vmem:[#allocation3] sm:$0x1] %v567
    // Predicated region
    $region38: #{tpu_custom_call.1} parent=1 // pred_check
      _
    $region39: #{tpu_custom_call.1} parent=1 // pred_check_branch
      %570 = sbr.rel (0) target = $region41
    $region40: #{tpu_custom_call.1} parent=1 // pred_region
      %s572 = ssub.s32 16, 16
      %573 = vsyncadd [#allocation4], %s572
      %s575 = sshll.u32 [#allocation3], 4
      %s576 = int_to_ptr.vmem [resolvable:$true] %s575
      %578 = dma.vmem_to_hbm [thread:$0]  %s576, 16, %s9, [#allocation4]
    $region41: #{tpu_custom_call.1} parent=1 // pred_fallthru
      _
    // Predicated region
    $region42: #{tpu_custom_call.1} parent=1 // pred_check
      _
    $region43: #{tpu_custom_call.1} parent=1 // pred_check_branch
      %580 = sbr.rel (0) target = $region45
    $region44: #{tpu_custom_call.1} parent=1 // pred_region
      %581 = dma.done [#allocation4], 16
    $region45: #{tpu_custom_call.1} parent=1 // pred_fallthru
      _
    %582 = vsyncpa [#allocation4], 1

</llo_original>
